<compile_context>
chip_gen: v7x
topology: tpu7x:2x2x1
jax: 0.10.0
libtpu: 0.0.40
codegen_flags: <defaults>
</compile_context>

<pallas_src>
import jax
import jax.numpy as jnp
from jax.experimental import pallas as pl
from jax.experimental.pallas import tpu as pltpu

LANE = 128


def _round_up(x, m):
    return ((x + m - 1) // m) * m


def _node_proj_kernel(h_ref, w_ref, o_ref):
    # h_ref: [tile_n, in_dims]   w_ref: [in_dims, 2*nc_pad] (resident)
    # o_ref: [tile_n, 2*nc_pad]  -> [ h @ W_src.T | h @ W_dst.T ]
    o_ref[...] = jnp.dot(
        h_ref[...], w_ref[...], preferred_element_type=jnp.float32
    ).astype(o_ref.dtype)


def _edge_score_kernel(p_ref, q_ref, b_ref, o_ref):
    # p_ref, q_ref: [tile_e, nc_pad]   b_ref: [1, nc_pad] (f32, resident)
    z = p_ref[...].astype(jnp.float32) + q_ref[...].astype(jnp.float32) + b_ref[...]
    y = 1.0 / (1.0 + jnp.exp(-z))  # exp on the EUP; f32 elementwise (v5e-safe)
    o_ref[...] = y.astype(o_ref.dtype)


def classify_mlp_predictor(src_ids, dst_ids, h, W, b, *, tile_e=1024, tile_n=512):
    """Forward pass of Classify_MLPPredictor.

    Args:
      src_ids: [E] int32 source node ids.
      dst_ids: [E] int32 destination node ids.
      h:       [N, in_dims] node features.
      W:       [n_classes, 2*in_dims] linear weight (PyTorch layout).
      b:       [n_classes] linear bias.
    Returns:
      [E, n_classes] edge scores (sigmoid of linear layer).
    """
    N, in_dims = h.shape
    n_classes = W.shape[0]
    E = src_ids.shape[0]
    nc_pad = _round_up(n_classes, LANE)

    # --- One-time weight prep (wrapper, not on the hot path) ---------------
    # Split the linear weight into src/dst halves, transpose once, and pack
    # lane-dense into [in_dims, 2*nc_pad] with zero padding.
    w_src_t = jnp.transpose(W[:, :in_dims]).astype(h.dtype)   # [in_dims, nc]
    w_dst_t = jnp.transpose(W[:, in_dims:]).astype(h.dtype)   # [in_dims, nc]
    w_both = jnp.zeros((in_dims, 2 * nc_pad), dtype=h.dtype)
    w_both = w_both.at[:, :n_classes].set(w_src_t)
    w_both = w_both.at[:, nc_pad:nc_pad + n_classes].set(w_dst_t)

    b_pad = jnp.zeros((1, nc_pad), jnp.float32)
    b_pad = b_pad.at[0, :n_classes].set(b.astype(jnp.float32))

    # --- Kernel 1: per-node projections, tiled over nodes ------------------
    # TODO(synk): add a K grid axis + f32 VMEM accumulator if in_dims is very
    # large (>= ~4k); here the full [in_dims, 2*nc_pad] weight stays resident.
    tile_n = min(tile_n, _round_up(N, 8))
    n_padded = _round_up(N, tile_n)
    h_p = jnp.zeros((n_padded, in_dims), h.dtype).at[:N].set(h)

    pq = pl.pallas_call(
        _node_proj_kernel,
        out_shape=jax.ShapeDtypeStruct((n_padded, 2 * nc_pad), h.dtype),
        grid_spec=pltpu.PrefetchScalarGridSpec(
            num_scalar_prefetch=0,
            grid=(n_padded // tile_n,),
            in_specs=[
                pl.BlockSpec((tile_n, in_dims), lambda i: (i, 0)),
                pl.BlockSpec((in_dims, 2 * nc_pad), lambda i: (0, 0)),
            ],
            out_specs=pl.BlockSpec((tile_n, 2 * nc_pad), lambda i: (i, 0)),
        ),
        compiler_params=pltpu.CompilerParams(
            dimension_semantics=("parallel",),
            vmem_limit_bytes=32 * 1024 * 1024,
        ),
    )(h_p, w_both)

    p = pq[:N, :nc_pad]        # src-side projections  [N, nc_pad]
    q = pq[:N, nc_pad:]        # dst-side projections  [N, nc_pad]

    # TODO(synk): per-edge row gather is done as XLA gather glue; a fused
    # in-kernel gather (scalar-prefetched ids + manual DMA) is possible but
    # offers little once the per-edge payload is only n_classes floats.
    ps = p[src_ids]            # [E, nc_pad]
    qd = q[dst_ids]            # [E, nc_pad]

    # --- Kernel 2: edge scores, tiled over edges ---------------------------
    tile_e = min(tile_e, _round_up(E, 8))
    e_padded = _round_up(E, tile_e)
    if e_padded != E:
        ps = jnp.zeros((e_padded, nc_pad), ps.dtype).at[:E].set(ps)
        qd = jnp.zeros((e_padded, nc_pad), qd.dtype).at[:E].set(qd)

    out = pl.pallas_call(
        _edge_score_kernel,
        out_shape=jax.ShapeDtypeStruct((e_padded, nc_pad), h.dtype),
        grid_spec=pltpu.PrefetchScalarGridSpec(
            num_scalar_prefetch=0,
            grid=(e_padded // tile_e,),
            in_specs=[
                pl.BlockSpec((tile_e, nc_pad), lambda i: (i, 0)),
                pl.BlockSpec((tile_e, nc_pad), lambda i: (i, 0)),
                pl.BlockSpec((1, nc_pad), lambda i: (0, 0)),
            ],
            out_specs=pl.BlockSpec((tile_e, nc_pad), lambda i: (i, 0)),
        ),
        compiler_params=pltpu.CompilerParams(
            dimension_semantics=("parallel",),
            vmem_limit_bytes=32 * 1024 * 1024,
        ),
    )(ps, qd, b_pad)

    return out[:E, :n_classes]


if __name__ == "__main__":
    # Small synthetic graph consistent with the module's forward:
    #   N nodes with in_dims features, E directed edges, n_classes outputs.
    in_dims = 16
    n_classes = 8
    N = 8
    E = 16

    key = jax.random.PRNGKey(0)
    k_h, k_w, k_b, k_s, k_d = jax.random.split(key, 5)

    h = jax.random.normal(k_h, (N, in_dims), dtype=jnp.float32)

    # Deterministic parameter init (shapes from nn.Linear(in_dims*2, n_classes)).
    fan_in = in_dims * 2
    bound = 1.0 / jnp.sqrt(jnp.float32(fan_in))
    W = jax.random.uniform(k_w, (n_classes, fan_in), dtype=jnp.float32,
                           minval=-bound, maxval=bound)
    b = jax.random.uniform(k_b, (n_classes,), dtype=jnp.float32,
                           minval=-bound, maxval=bound)

    # Deterministic edge list.
    src_ids = jax.random.randint(k_s, (E,), 0, N, dtype=jnp.int32)
    dst_ids = jax.random.randint(k_d, (E,), 0, N, dtype=jnp.int32)

    scores = classify_mlp_predictor(src_ids, dst_ids, h, W, b)
    scores = jax.block_until_ready(scores)

    # Reference check in plain JAX (original concat formulation).
    x_ref = jnp.concatenate([h[src_ids], h[dst_ids]], axis=1)
    ref = jax.nn.sigmoid(x_ref @ W.T + b)
    assert scores.shape == (E, n_classes)
    assert jnp.allclose(scores, ref, atol=1e-5, rtol=1e-5), float(
        jnp.max(jnp.abs(scores - ref)))

    print("KERNEL_OK")
</pallas_src>

<mosaic_0001>
module attributes {stable_mosaic.version = 11 : i64} {
  func.func @_node_proj_kernel(%arg0: i32, %arg1: memref<8x16xf32, #tpu.memory_space<vmem>>, %arg2: memref<16x256xf32, #tpu.memory_space<vmem>>, %arg3: memref<8x256xf32, #tpu.memory_space<vmem>>) attributes {dimension_semantics = [#tpu.dimension_semantics<parallel>], iteration_bounds = array<i64: 1>, scalar_prefetch = 0 : i64, scratch_operands = 0 : i64, tpu.core_type = #tpu.core_type<tc>, window_params = [{transform_indices = @transform_0, window_bounds = array<i64: 8, 16>}, {pipeline_mode = #tpu.pipeline_mode<synchronous>, transform_indices = @transform_1, window_bounds = array<i64: 16, 256>}, {transform_indices = @transform_2, window_bounds = array<i64: 8, 256>}]} {
    %c0 = arith.constant 0 : index
    %c0_0 = arith.constant 0 : index
    %0 = vector.load %arg1[%c0, %c0_0] : memref<8x16xf32, #tpu.memory_space<vmem>>, vector<8x16xf32>
    %c0_1 = arith.constant 0 : index
    %c0_2 = arith.constant 0 : index
    %1 = vector.load %arg2[%c0_1, %c0_2] : memref<16x256xf32, #tpu.memory_space<vmem>>, vector<16x256xf32>
    %cst = arith.constant dense<0.000000e+00> : vector<8x256xf32>
    %2 = tpu.matmul %0, %1, %cst {dimension_numbers = #tpu.dot_dimension_numbers<[1], [0], [0], [1], [0, 0, 1, 1], [], []>} : vector<8x16xf32>, vector<16x256xf32>, vector<8x256xf32> -> vector<8x256xf32>
    %c0_3 = arith.constant 0 : index
    %c0_4 = arith.constant 0 : index
    %3 = vector.load %arg3[%c0_3, %c0_4] : memref<8x256xf32, #tpu.memory_space<vmem>>, vector<8x256xf32>
    tpu.vector_store %arg3[%c0_3, %c0_4], %2 {strides = array<i32>} : memref<8x256xf32, #tpu.memory_space<vmem>>, vector<8x256xf32>,
    return
  }
  func.func @transform_0(%arg0: i32) -> (i32, i32) {
    %c0_i32 = arith.constant 0 : i32
    %c0_i32_0 = arith.constant 0 : i32
    return %arg0, %c0_i32 : i32, i32
  }
  func.func @transform_1(%arg0: i32) -> (i32, i32) {
    %c0_i32 = arith.constant 0 : i32
    %c0_i32_0 = arith.constant 0 : i32
    %c0_i32_1 = arith.constant 0 : i32
    return %c0_i32, %c0_i32_0 : i32, i32
  }
  func.func @transform_2(%arg0: i32) -> (i32, i32) {
    %c0_i32 = arith.constant 0 : i32
    %c0_i32_0 = arith.constant 0 : i32
    return %arg0, %c0_i32 : i32, i32
  }
}

</mosaic_0001>

<llo_original>
// kernel: tpu_custom_call.1
$region0: #{tpu_custom_call.1}
  #allocation0 [shape = 'u32[]', space=smem, size = 0x4, offset = 0x4, fixed_abs, tag = 'smem constant byte address 0x4 - core index']
  #allocation1 [shape = 'u32[144,128]{1,0:T(1,128)}', space=vmem, size = 0x12000, scoped, tag = 'internal scratch']
  %s0 = inlined_call_operand.hbm [shape: f32[8,16], index: 0, kind: input, shape index: {}]
  %s1 = inlined_call_operand.hbm [shape: f32[16,256], index: 1, kind: input, shape index: {}]
  %s2 = inlined_call_operand.hbm [shape: f32[8,256], index: 2, kind: output, shape index: {}]
  %s3 = sld [smem:[#allocation0]]
  $region26: #{tpu_custom_call.1} parent=0
    _
  %s5 = ssub.s32 1, %s3
  %s6 = scalar_select 0, %s5, %s3
  $region1: #{tpu_custom_call.1} parent=0
    #allocation2 [shape = 'u8[4096]{0}', space=vmem, size = 0x1000, scoped, tag = 'input window, operand 0, single buffered']
    #allocation3 [shape = 's32[1]{0}', space=sflag, size = 0x4, scoped, tag = 'scoped memory for tpu_custom_call.1']
    #allocation4 [shape = 's32[1]{0}', space=sflag, size = 0x4, scoped, tag = 'scoped memory for tpu_custom_call.1']
    #allocation5 [shape = 'u8[16384]{0}', space=vmem, size = 0x4000, scoped, tag = 'input window, operand 1, single buffered']
    #allocation6 [shape = 's32[1]{0}', space=sflag, size = 0x4, scoped, tag = 'scoped memory for tpu_custom_call.1']
    #allocation7 [shape = 'u8[8192]{0}', space=vmem, size = 0x2000, scoped, tag = 'output window, operand 0, single buffered']
    %7 = vsyncpa [#allocation3], 0
    %8 = vsyncpa [#allocation6], 0
    %9 = vsyncpa [#allocation4], 0
    // Predicated region
    $region2: #{tpu_custom_call.1} parent=1 // pred_check
      _
    $region3: #{tpu_custom_call.1} parent=1 // pred_check_branch
      %11 = sbr.rel (0) target = $region5
    $region4: #{tpu_custom_call.1} parent=1 // pred_region
      %s13 = ssub.s32 128, 128
      %14 = vsyncadd [#allocation3], %s13
      %s16 = sshll.u32 [#allocation2], 4
      %s17 = int_to_ptr.vmem [resolvable:$true] %s16
      %19 = dma.hbm_to_vmem [thread:$0]  %s0, 128, %s17, [#allocation3]
    $region5: #{tpu_custom_call.1} parent=1 // pred_fallthru
      _
    // Predicated region
    $region6: #{tpu_custom_call.1} parent=1 // pred_check
      _
    $region7: #{tpu_custom_call.1} parent=1 // pred_check_branch
      %21 = sbr.rel (0) target = $region9
    $region8: #{tpu_custom_call.1} parent=1 // pred_region
      %s23 = ssub.s32 512, 512
      %24 = vsyncadd [#allocation6], %s23
      %s25 = sshll.u32 [#allocation5], 4
      %s26 = int_to_ptr.vmem [resolvable:$true] %s25
      %31 = dma.hbm_to_vmem [thread:$0]  %s1, 512, %s26, [#allocation6], 256, 256, 16
    $region9: #{tpu_custom_call.1} parent=1 // pred_fallthru
      _
    // Predicated region
    $region10: #{tpu_custom_call.1} parent=1 // pred_check
      _
    $region11: #{tpu_custom_call.1} parent=1 // pred_check_branch
      %33 = sbr.rel (0) target = $region13
    $region12: #{tpu_custom_call.1} parent=1 // pred_region
      %34 = dma.done [#allocation3], 128
    $region13: #{tpu_custom_call.1} parent=1 // pred_fallthru
      _
    // Predicated region
    $region14: #{tpu_custom_call.1} parent=1 // pred_check
      _
    $region15: #{tpu_custom_call.1} parent=1 // pred_check_branch
      %36 = sbr.rel (0) target = $region17
    $region16: #{tpu_custom_call.1} parent=1 // pred_region
      %37 = dma.done [#allocation6], 512
    $region17: #{tpu_custom_call.1} parent=1 // pred_fallthru
      _
    %v38 = vld [vmem:[#allocation2] sm:$0xff]
    %v39 = vld [vmem:[#allocation5] sm:$0xff]
    %v40 = vld [vmem:[#allocation5 + $0x8] sm:$0xff]
    %v41 = vld [vmem:[#allocation5 + $0x10] sm:$0xff]
    %v42 = vld [vmem:[#allocation5 + $0x18] sm:$0xff]
    %vm43 = vcmask 130048
    %v45 = vsel %vm43, %v38, 0
    %47 = vmatprep.subr.mxu0 %v40
    %48 = vmatpush1.msra.mxu0 %v39
    %49 = vmatprep.subr.mxu0 %v42
    %50 = vmatpush1.msra.mxu0 %v41
    %51 = vmatprep.subr.mxu0 0.0
    %52 = vmatpush1.msra.mxu0 0.0
    %53 = vmatprep.subr.mxu0 0.0
    %54 = vmatpush1.msra.mxu0 0.0
    %55 = vmatprep.subr.mxu0 0.0
    %56 = vmatpush1.msra.mxu0 0.0
    %57 = vmatprep.subr.mxu0 0.0
    %58 = vmatpush1.msra.mxu0 0.0
    %59 = vmatprep.subr.mxu0 0.0
    %60 = vmatpush1.msra.mxu0 0.0
    %61 = vmatprep.subr.mxu0 0.0
    %62 = vmatpush1.msra.mxu0 0.0
    %63 = vmatprep.subr.mxu0 0.0
    %64 = vmatpush1.msra.mxu0 0.0
    %65 = vmatprep.subr.mxu0 0.0
    %66 = vmatpush1.msra.mxu0 0.0
    %67 = vmatprep.subr.mxu0 0.0
    %68 = vmatpush1.msra.mxu0 0.0
    %69 = vmatprep.subr.mxu0 0.0
    %70 = vmatpush1.msra.mxu0 0.0
    %71 = vmatprep.subr.mxu0 0.0
    %72 = vmatpush1.msra.mxu0 0.0
    %73 = vmatprep.subr.mxu0 0.0
    %74 = vmatpush1.msra.mxu0 0.0
    %75 = vmatprep.subr.mxu0 0.0
    %76 = vmatpush1.msra.mxu0 0.0
    %77 = vmatprep.subr.mxu0 0.0
    %78 = vmatpush1.msra.mxu0 0.0
    %79 = vmatprep.subr.mxu0 0.0
    %80 = vmatpush1.msra.mxu0 0.0
    %81 = vmatprep.subr.mxu0 0.0
    %82 = vmatpush1.msra.mxu0 0.0
    %83 = vmatprep.subr.mxu0 0.0
    %84 = vmatpush1.msra.mxu0 0.0
    %85 = vmatprep.subr.mxu0 0.0
    %86 = vmatpush1.msra.mxu0 0.0
    %87 = vmatprep.subr.mxu0 0.0
    %88 = vmatpush1.msra.mxu0 0.0
    %89 = vmatprep.subr.mxu0 0.0
    %90 = vmatpush1.msra.mxu0 0.0
    %91 = vmatprep.subr.mxu0 0.0
    %92 = vmatpush1.msra.mxu0 0.0
    %93 = vmatprep.subr.mxu0 0.0
    %94 = vmatpush1.msra.mxu0 0.0
    %95 = vmatprep.subr.mxu0 0.0
    %96 = vmatpush1.msra.mxu0 0.0
    %97 = vmatprep.subr.mxu0 0.0
    %98 = vmatpush1.msra.mxu0 0.0
    %99 = vmatprep.subr.mxu0 0.0
    %100 = vmatpush1.msra.mxu0 0.0
    %101 = vmatprep.subr.mxu0 0.0
    %102 = vmatpush1.msra.mxu0 0.0
    %103 = vmatprep.subr.mxu0 0.0
    %104 = vmatpush1.msra.mxu0 0.0
    %105 = vmatprep.subr.mxu0 0.0
    %106 = vmatpush1.msra.mxu0 0.0
    %107 = vmatprep.subr.mxu0 0.0
    %108 = vmatpush1.msra.mxu0 0.0
    %109 = vmatprep.subr.mxu0 0.0
    %110 = vmatpush1.msra.mxu0 0.0
    %111 = vmatprep.mubr.f32.mxu0 0.0
    %112 = vmatmul.mubr.f32.gmra.mrb[0].mxu0 %v45
    %v113 = vpop.f32.mrb[0].mxu0
    %v114 = vadd.f32 0.0, %v113
    %v115 = vpop.f32.mrb[0].mxu0
    %v116 = vadd.f32 0.0, %v115
    %117 = vdwg.mxu0
    %118 = vst [vmem:[#allocation7] sm:$0xff] %v114
    %119 = vst [vmem:[#allocation7 + $0x8] sm:$0xff] %v116
    // Predicated region
    $region18: #{tpu_custom_call.1} parent=1 // pred_check
      _
    $region19: #{tpu_custom_call.1} parent=1 // pred_check_branch
      %121 = sbr.rel (0) target = $region21
    $region20: #{tpu_custom_call.1} parent=1 // pred_region
      %s123 = ssub.s32 256, 256
      %124 = vsyncadd [#allocation4], %s123
      %s126 = sshll.u32 [#allocation7], 4
      %s127 = int_to_ptr.vmem [resolvable:$true] %s126
      %129 = dma.vmem_to_hbm [thread:$0]  %s127, 256, %s2, [#allocation4]
    $region21: #{tpu_custom_call.1} parent=1 // pred_fallthru
      _
    // Predicated region
    $region22: #{tpu_custom_call.1} parent=1 // pred_check
      _
    $region23: #{tpu_custom_call.1} parent=1 // pred_check_branch
      %131 = sbr.rel (0) target = $region25
    $region24: #{tpu_custom_call.1} parent=1 // pred_region
      %132 = dma.done [#allocation4], 256
    $region25: #{tpu_custom_call.1} parent=1 // pred_fallthru
      _
    %133 = vsyncpa [#allocation3], 1
    %134 = vsyncpa [#allocation6], 1
    %135 = vsyncpa [#allocation4], 1

</llo_original>
